<compile_context>
chip_gen: v7x
topology: tpu7x:2x2x1
jax: 0.10.0
libtpu: 0.0.40
codegen_flags: <defaults>
</compile_context>

<pallas_src>
import functools

import jax
import jax.numpy as jnp
from jax.experimental import pallas as pl
from jax.experimental.pallas import tpu as pltpu

GAMMA = 2.0
ALPHA = 3.0


def _round_up(x, m):
    return ((x + m - 1) // m) * m


def _pick_tile_n(n, c, dtype):
    """Batch tile sized against the true (lane-padded, double-buffered) VMEM cost."""
    itemsize = jnp.dtype(dtype).itemsize
    # Sublane granularity: 8 rows for 4-byte dtypes, 16 for bf16, 32 for int8.
    sublane = max(8, 32 // max(1, itemsize))
    c_padded = _round_up(c, 128)
    # Real per-row VMEM bytes: lane-padded logits row + lane-padded int32 target row.
    row_bytes = c_padded * itemsize + 128 * 4
    # ~4 MiB per buffer -> ~8 MiB once BlockSpec double-buffers; fits the v5e
    # 16 MiB scoped-VMEM default and v7x's 32 MiB default without retiling.
    target_bytes = 4 * 1024 * 1024
    tile = target_bytes // row_bytes
    tile = max(sublane, min(8192, (tile // sublane) * sublane))
    tile = min(tile, _round_up(n, sublane))
    # If the whole batch fits in one tile but is bigger than one sublane group,
    # split into >= 2 tiles so the "parallel" grid axis can use both v7x cores.
    if n > sublane and tile >= _round_up(n, sublane):
        tile = max(sublane, _round_up(pl.cdiv(n, 2), sublane))
    return tile


def _focal_loss_kernel(logits_ref, targets_ref, out_ref, *, n_total, tile_n,
                       gamma, alpha):
    # logits_ref : (tile_n, C) float (f32 or bf16) in VMEM (native dtype)
    # targets_ref: (tile_n, 1) int32 in VMEM
    # out_ref    : (1, 128) f32 in VMEM -- per-tile partial sum (lane-dense store)
    x = logits_ref[...]                 # keep native dtype; no full-tile upcast
    targets = targets_ref[...]
    tn, c = x.shape

    # Row max in the native dtype (bf16 is VPU-native on v6e/v7x); the value
    # is exact since the inputs are already in that dtype.
    row_max = jnp.max(x, axis=-1, keepdims=True)                     # (tn, 1)
    row_max_f32 = row_max.astype(jnp.float32)

    # exp(x - max) feeds only this reduction, so the per-vreg upcast/subtract/
    # exp fuse into the lane-sum without a live (tn, c) f32 temporary.
    sum_exp = jnp.sum(jnp.exp(x.astype(jnp.float32) - row_max_f32),
                      axis=-1, keepdims=True)                        # (tn, 1)

    # Gather the target logit from the RAW logits (one-hot select + lane sum).
    # Note: out-of-range targets silently select 0 (loss = logsumexp) instead
    # of erroring like torch.nn.functional.cross_entropy.
    col_ids = jax.lax.broadcasted_iota(jnp.int32, (tn, c), 1)
    tgt_logit = jnp.sum(
        jnp.where(col_ids == targets, x, jnp.zeros_like(x)).astype(jnp.float32),
        axis=-1, keepdims=True)                                      # (tn, 1)

    # Numerically stable cross entropy, reduction='none':
    #   ce = logsumexp(x) - x[target] = log(sum_exp) + max - x[target]
    ce = jnp.log(sum_exp) - (tgt_logit - row_max_f32)                # (tn, 1)

    # Focal reweighting. gamma == 2.0 -> explicit square (no pow -> no log/exp
    # on the EUP and no NaN if rounding makes ce slightly negative).
    pt = jnp.exp(-ce)
    d = 1.0 - pt
    if gamma == 2.0:
        w = d * d
    else:
        w = jnp.power(jnp.maximum(d, 0.0), gamma)
    focal = alpha * w * ce                                           # (tn, 1)

    # Mask rows past the true batch size (last grid tile may be ragged).
    # jnp.where (not multiply-by-mask) so garbage padded rows cannot leak NaN.
    row_ids = (pl.program_id(0) * tile_n
               + jax.lax.broadcasted_iota(jnp.int32, (tn, 1), 0))
    focal = jnp.where(row_ids < n_total, focal, 0.0)

    partial = jnp.sum(focal)
    # Full 128-lane unmasked store; the wrapper reads lane 0 of each tile row.
    out_ref[...] = jnp.broadcast_to(partial, (1, 128)).astype(jnp.float32)


def focal_loss(logits, targets, *, gamma=GAMMA, alpha=ALPHA, tile_n=None):
    """logits: (N, C) float (f32/bf16), targets: (N,) int -> scalar f32 mean loss."""
    n, c = logits.shape
    if tile_n is None:
        tile_n = _pick_tile_n(n, c, logits.dtype)
    num_tiles = pl.cdiv(n, tile_n)
    targets_2d = targets.astype(jnp.int32).reshape(n, 1)

    kernel = functools.partial(_focal_loss_kernel, n_total=n, tile_n=tile_n,
                               gamma=gamma, alpha=alpha)

    partials = pl.pallas_call(
        kernel,
        out_shape=jax.ShapeDtypeStruct((num_tiles, 128), jnp.float32),
        grid=(num_tiles,),
        in_specs=[
            pl.BlockSpec((tile_n, c), lambda i: (i, 0)),   # logits tile (native dtype)
            pl.BlockSpec((tile_n, 1), lambda i: (i, 0)),   # targets tile
        ],
        out_specs=pl.BlockSpec((1, 128), lambda i: (i, 0)),
        compiler_params=pltpu.CompilerParams(
            dimension_semantics=("parallel",)),
    )(logits, targets_2d)

    # Tiny wrapper-side reduction (num_tiles values) + division by the true N.
    return jnp.sum(partials[:, 0]) / jnp.float32(n)


def focal_loss_ref(logits, targets, gamma=GAMMA, alpha=ALPHA):
    """Pure-JAX reference mirroring the PyTorch module."""
    logp = jax.nn.log_softmax(logits.astype(jnp.float32), axis=-1)
    ce = -jnp.take_along_axis(logp, targets[:, None].astype(jnp.int32),
                              axis=-1)[:, 0]
    pt = jnp.exp(-ce)
    return jnp.mean(alpha * (1.0 - pt) ** gamma * ce)


if __name__ == "__main__":
    key = jax.random.PRNGKey(0)

    # Small shapes consistent with the module: batch=8 samples, 32 classes.
    k1, k2 = jax.random.split(key)
    N, C = 8, 32
    logits = jax.random.normal(k1, (N, C), dtype=jnp.float32)
    targets = jax.random.randint(k2, (N,), 0, C, dtype=jnp.int32)

    out = focal_loss(logits, targets)
    jax.block_until_ready(out)
    ref = focal_loss_ref(logits, targets)
    assert jnp.allclose(out, ref, rtol=1e-5, atol=1e-5), (out, ref)

    # Second check: bf16 logits + multi-tile grid with a ragged last tile.
    k3, k4 = jax.random.split(k1)
    N2, C2 = 200, 128
    logits2 = jax.random.normal(k3, (N2, C2), dtype=jnp.bfloat16)
    targets2 = jax.random.randint(k4, (N2,), 0, C2, dtype=jnp.int32)
    out2 = focal_loss(logits2, targets2, tile_n=64)
    jax.block_until_ready(out2)
    ref2 = focal_loss_ref(logits2, targets2)
    assert jnp.allclose(out2, ref2, rtol=1e-3, atol=1e-3), (out2, ref2)

    # Third check: auto-picked tile size (exercises _pick_tile_n + >=2 tiles).
    k5, k6 = jax.random.split(k3)
    N3, C3 = 1000, 32
    logits3 = jax.random.normal(k5, (N3, C3), dtype=jnp.float32)
    targets3 = jax.random.randint(k6, (N3,), 0, C3, dtype=jnp.int32)
    out3 = focal_loss(logits3, targets3)
    jax.block_until_ready(out3)
    ref3 = focal_loss_ref(logits3, targets3)
    assert jnp.allclose(out3, ref3, rtol=1e-5, atol=1e-5), (out3, ref3)

    print("KERNEL_OK")
</pallas_src>

<mosaic_0001>
module attributes {stable_mosaic.version = 11 : i64} {
  func.func @_focal_loss_kernel(%arg0: i32, %arg1: memref<8x32xf32, #tpu.memory_space<vmem>>, %arg2: memref<8x1xi32, #tpu.memory_space<vmem>>, %arg3: memref<1x128xf32, #tpu.memory_space<vmem>>) attributes {dimension_semantics = [#tpu.dimension_semantics<parallel>], iteration_bounds = array<i64: 1>, scalar_prefetch = 0 : i64, scratch_operands = 0 : i64, tpu.core_type = #tpu.core_type<tc>, window_params = [{transform_indices = @transform_0, window_bounds = array<i64: 8, 32>}, {transform_indices = @transform_1, window_bounds = array<i64: 8, 1>}, {transform_indices = @transform_2, window_bounds = array<i64: 1, 128>}]} {
    %c0 = arith.constant 0 : index
    %c0_0 = arith.constant 0 : index
    %0 = vector.load %arg1[%c0, %c0_0] : memref<8x32xf32, #tpu.memory_space<vmem>>, vector<8x32xf32>
    %c0_1 = arith.constant 0 : index
    %c0_2 = arith.constant 0 : index
    %1 = vector.load %arg2[%c0_1, %c0_2] : memref<8x1xi32, #tpu.memory_space<vmem>>, vector<8x1xi32>
    %cst = arith.constant dense<0xFF800000> : vector<8xf32>
    %2 = vector.multi_reduction <maximumf>, %0, %cst [1] : vector<8x32xf32> to vector<8xf32>
    %3 = vector.shape_cast %2 : vector<8xf32> to vector<8x1xf32>
    %4 = vector.broadcast %3 : vector<8x1xf32> to vector<8x32xf32>
    %5 = arith.subf %0, %4 : vector<8x32xf32>
    %6 = math.exp %5 : vector<8x32xf32>
    %cst_3 = arith.constant dense<0.000000e+00> : vector<8xf32>
    %7 = vector.multi_reduction <add>, %6, %cst_3 [1] : vector<8x32xf32> to vector<8xf32>
    %8 = vector.shape_cast %7 : vector<8xf32> to vector<8x1xf32>
    %9 = tpu.iota {dimensions = array<i32: 1>} : vector<8x32xi32>
    %10 = vector.broadcast %1 : vector<8x1xi32> to vector<8x32xi32>
    %11 = arith.cmpi eq, %9, %10 : vector<8x32xi32>
    %cst_4 = arith.constant 0.000000e+00 : f32
    %12 = vector.broadcast %cst_4 : f32 to vector<8x32xf32>
    %13 = arith.select %11, %0, %12 : vector<8x32xi1>, vector<8x32xf32>
    %cst_5 = arith.constant dense<0.000000e+00> : vector<8xf32>
    %14 = vector.multi_reduction <add>, %13, %cst_5 [1] : vector<8x32xf32> to vector<8xf32>
    %15 = vector.shape_cast %14 : vector<8xf32> to vector<8x1xf32>
    %16 = math.log %8 : vector<8x1xf32>
    %17 = arith.subf %15, %3 : vector<8x1xf32>
    %18 = arith.subf %16, %17 : vector<8x1xf32>
    %cst_6 = arith.constant 0.000000e+00 : f32
    %19 = vector.broadcast %cst_6 : f32 to vector<8x1xf32>
    %20 = arith.subf %19, %18 : vector<8x1xf32>
    %21 = math.exp %20 : vector<8x1xf32>
    %cst_7 = arith.constant 1.000000e+00 : f32
    %22 = vector.broadcast %cst_7 : f32 to vector<8x1xf32>
    %23 = arith.subf %22, %21 : vector<8x1xf32>
    %24 = arith.mulf %23, %23 : vector<8x1xf32>
    %cst_8 = arith.constant 3.000000e+00 : f32
    %25 = vector.broadcast %cst_8 : f32 to vector<8x1xf32>
    %26 = arith.mulf %25, %24 : vector<8x1xf32>
    %27 = arith.mulf %26, %18 : vector<8x1xf32>
    %c8_i32 = arith.constant 8 : i32
    %28 = arith.muli %arg0, %c8_i32 : i32
    %29 = tpu.iota {dimensions = array<i32: 0>} : vector<8x1xi32>
    %30 = vector.broadcast %28 : i32 to vector<8x1xi32>
    %31 = arith.addi %30, %29 : vector<8x1xi32>
    %c8_i32_9 = arith.constant 8 : i32
    %32 = vector.broadcast %c8_i32_9 : i32 to vector<8x1xi32>
    %33 = arith.cmpi slt, %31, %32 : vector<8x1xi32>
    %cst_10 = arith.constant 0.000000e+00 : f32
    %34 = vector.broadcast %cst_10 : f32 to vector<8x1xf32>
    %35 = arith.select %33, %27, %34 : vector<8x1xi1>, vector<8x1xf32>
    %36 = vector.shape_cast %35 : vector<8x1xf32> to vector<1x8x1xf32>
    %cst_11 = arith.constant dense<0.000000e+00> : vector<1xf32>
    %37 = vector.multi_reduction <add>, %36, %cst_11 [1, 2] : vector<1x8x1xf32> to vector<1xf32>
    %38 = vector.shape_cast %37 : vector<1xf32> to vector<1x1x1xf32>
    %39 = vector.extract %38[0, 0, 0] : f32 from vector<1x1x1xf32>
    %40 = vector.broadcast %39 : f32 to vector<1x128xf32>
    %c0_12 = arith.constant 0 : index
    %c0_13 = arith.constant 0 : index
    %41 = vector.load %arg3[%c0_12, %c0_13] : memref<1x128xf32, #tpu.memory_space<vmem>>, vector<1x128xf32>
    tpu.vector_store %arg3[%c0_12, %c0_13], %40 {strides = array<i32>} : memref<1x128xf32, #tpu.memory_space<vmem>>, vector<1x128xf32>,
    return
  }
  func.func @transform_0(%arg0: i32) -> (i32, i32) {
    %c0_i32 = arith.constant 0 : i32
    %c0_i32_0 = arith.constant 0 : i32
    return %arg0, %c0_i32 : i32, i32
  }
  func.func @transform_1(%arg0: i32) -> (i32, i32) {
    %c0_i32 = arith.constant 0 : i32
    %c0_i32_0 = arith.constant 0 : i32
    return %arg0, %c0_i32 : i32, i32
  }
  func.func @transform_2(%arg0: i32) -> (i32, i32) {
    %c0_i32 = arith.constant 0 : i32
    %c0_i32_0 = arith.constant 0 : i32
    return %arg0, %c0_i32 : i32, i32
  }
}

</mosaic_0001>

<llo_original>
// kernel: tpu_custom_call.1
$region0: #{tpu_custom_call.1}
  #allocation0 [shape = 'u32[]', space=smem, size = 0x4, offset = 0x4, fixed_abs, tag = 'smem constant byte address 0x4 - core index']
  #allocation1 [shape = 'u32[144,128]{1,0:T(1,128)}', space=vmem, size = 0x12000, scoped, tag = 'internal scratch']
  %s0 = inlined_call_operand.vmem [shape: f32[8,32], index: 0, kind: input, shape index: {}]
  %s1 = inlined_call_operand.vmem [shape: s32[8,1], index: 1, kind: input, shape index: {}]
  %s2 = inlined_call_operand.hbm [shape: f32[1,128], index: 2, kind: output, shape index: {}]
  %s3 = sld [smem:[#allocation0]]
  $region18: #{tpu_custom_call.1} parent=0
    _
  %s5 = ssub.s32 1, %s3
  %s6 = scalar_select 0, %s5, %s3
  $region1: #{tpu_custom_call.1} parent=0
    #allocation2 [shape = 'u8[512]{0}', space=vmem, size = 0x400, scoped, tag = 'output window, operand 0, single buffered']
    #allocation3 [shape = 's32[1]{0}', space=sflag, size = 0x4, scoped, tag = 'scoped memory for tpu_custom_call.1']
    %7 = vsyncpa [#allocation3], 0
    // Predicated region
    $region2: #{tpu_custom_call.1} parent=1 // pred_check
      _
    $region3: #{tpu_custom_call.1} parent=1 // pred_check_branch
      %9 = sbr.rel (0) target = $region5
    $region4: #{tpu_custom_call.1} parent=1 // pred_region
      _
    $region5: #{tpu_custom_call.1} parent=1 // pred_fallthru
      _
    // Predicated region
    $region6: #{tpu_custom_call.1} parent=1 // pred_check
      _
    $region7: #{tpu_custom_call.1} parent=1 // pred_check_branch
      %11 = sbr.rel (0) target = $region9
    $region8: #{tpu_custom_call.1} parent=1 // pred_region
      _
    $region9: #{tpu_custom_call.1} parent=1 // pred_fallthru
      _
    %v12 = vld [vmem:[%s0] sm:$0xff]
    %v13 = vld [vmem:[%s1] sm:$0xff]
    %vm14 = vcmask 261120
    %v15 = vsel %vm14, %v12, -inf
    %16 = vmax.xlane.f32.xlu0 %v15
    %v17 = vpop.xlane.xlu0 %16
    %v18 = vsub.f32 %v12, %v17
    %v19 = vmul.f32 %v18, 1.442695
    %v20 = vpow.pop %v19
    %v21 = vsel %vm14, %v20, 0.0
    %22 = vadd.xlane.f32.xlu0 %v21
    %v23 = vpop.xlane.xlu0 %22
    %v24 = vlaneseq
    %v25 = vand.u32 %v24, 127
    %26 = vset.pattern.permute.xlu0 0
    %27 = vperm.xlu0 %26, %v13
    %v28 = vpop.permute.xlu0 %27
    %vm29 = vcmp.eq.s32.totalorder %v25, %v28
    %v30 = vsel %vm29, %v12, 0.0
    %v31 = vsel %vm14, %v30, 0.0
    %32 = vadd.xlane.f32.xlu0 %v31
    %v33 = vpop.xlane.xlu0 %32
    %v34 = vlog2.pop %v23
    %v35 = vmul.f32 %v34, 0.6931472
    %v36 = vsub.f32 %v33, %v17
    %v37 = vsub.f32 %v35, %v36
    %v38 = vsub.f32 0.0, %v37
    %v39 = vmul.f32 %v38, 1.442695
    %v40 = vpow.pop %v39
    %v41 = vsub.f32 1.0, %v40
    %v42 = vmul.f32 %v41, %v41
    %v43 = vmul.f32 %v42, 3.0
    %v44 = vmul.f32 %v43, %v37
    %s45 = smul.u32 0, 8
    %v46 = vlaneseq
    %v47 = vshrl.u32 %v46, 7
    %v48 = vstv %s45
    %v49 = vadd.s32 %v48, %v47
    %vm50 = vcmp.lt.s32.totalorder %v49, 8
    %v51 = vsel %vm50, %v44, 0.0
    %vm52 = vcmask 7168
    %v53 = vsel %vm52, %v51, 0.0
    %54 = vadd.xlane.f32.xlu0 %v53
    %v55 = vpop.xlane.xlu0 %54
    %v56 = vrot.slane %v55, 4
    %v57 = vadd.f32 %v55, %v56
    %v58 = vrot.slane %v57, 2
    %v59 = vadd.f32 %v57, %v58
    %v60 = vrot.slane %v59, 1
    %v61 = vadd.f32 %v59, %v60
    %s62 = vtos %v61
    %v63 = vstv %s62
    %64 = vst [vmem:[#allocation2] sm:$0x1] %v63
    // Predicated region
    $region10: #{tpu_custom_call.1} parent=1 // pred_check
      _
    $region11: #{tpu_custom_call.1} parent=1 // pred_check_branch
      %66 = sbr.rel (0) target = $region13
    $region12: #{tpu_custom_call.1} parent=1 // pred_region
      %s68 = ssub.s32 16, 16
      %69 = vsyncadd [#allocation3], %s68
      %s71 = sshll.u32 [#allocation2], 4
      %s72 = int_to_ptr.vmem [resolvable:$true] %s71
      %74 = dma.vmem_to_hbm [thread:$0]  %s72, 16, %s2, [#allocation3]
    $region13: #{tpu_custom_call.1} parent=1 // pred_fallthru
      _
    // Predicated region
    $region14: #{tpu_custom_call.1} parent=1 // pred_check
      _
    $region15: #{tpu_custom_call.1} parent=1 // pred_check_branch
      %76 = sbr.rel (0) target = $region17
    $region16: #{tpu_custom_call.1} parent=1 // pred_region
      %77 = dma.done [#allocation3], 16
    $region17: #{tpu_custom_call.1} parent=1 // pred_fallthru
      _
    %78 = vsyncpa [#allocation3], 1

</llo_original>
